<compile_context>
chip_gen: v5e
topology: v5e:2x2
jax: 0.10.0
libtpu: 0.0.40
codegen_flags: <defaults>
</compile_context>

<pallas_src>
import jax
import jax.numpy as jnp
from jax.experimental import pallas as pl
from jax.experimental.pallas import tpu as pltpu


IN_F = 2
HIDDEN = 32
OUT_F = 3

LANES = 128            # TPU lane width
PACK = 8               # points packed per lane column (sublane-dense f32 tiles)
GRAN = PACK * LANES    # 1024 points: tile-size / padding granularity
IN_ROWS = PACK * IN_F      # 16  (multiple of 8 -> dense f32 sublane tiling)
HID_ROWS = PACK * HIDDEN   # 256
OUT_ROWS = PACK * OUT_F    # 24  (multiple of 8 -> dense f32 sublane tiling)


def pointsnet_kernel(x_ref, w1_ref, b1_ref, w2_ref, b2_ref, o_ref):
    # x_ref : (16,  bc)  packed input tile: lane column c holds points 8c..8c+7
    # w1_ref: (256, 16)  block-diagonal fc1 weight (8 copies of the (32,2) W1)
    # b1_ref: (256, 1)   tiled fc1 bias
    # w2_ref: (24, 256)  block-diagonal fc2 weight (8 copies of the (3,32) W2)
    # b2_ref: (24, 1)    tiled fc2 bias
    # o_ref : (24,  bc)  packed output tile
    x = x_ref[...]

    # fc1 + bias + ReLU (MXU matmul, f32 accumulate; batch on lanes).
    h = jnp.dot(w1_ref[...], x, preferred_element_type=jnp.float32) + b1_ref[...]
    h = jnp.maximum(h, 0.0)

    # Dropout(p=0.5) in eval mode is the identity.
    # TODO(synk): training-mode dropout mask via pltpu.prng_random_bits.

    # fc2 + bias.
    y = jnp.dot(w2_ref[...], h, preferred_element_type=jnp.float32) + b2_ref[...]
    o_ref[...] = y.astype(o_ref.dtype)


def _tensorcores_per_chip():
    """2 on multi-TensorCore chips (v7x / v4 / v5p), else 1 (v5e / v6e)."""
    try:
        kind = jax.devices()[0].device_kind.lower()
    except Exception:
        return 1
    return 2 if any(tag in kind for tag in ("v7", "7x", "v4", "v5p")) else 1


def _choose_tiles(n, bm):
    """Pick (padded batch, points-per-tile); both multiples of GRAN (=1024)."""
    bm = max(GRAN, (int(bm) // GRAN) * GRAN)
    n_pad = pl.cdiv(n, GRAN) * GRAN
    bm_eff = min(bm, n_pad)
    ncores = _tensorcores_per_chip()
    # Only force multiple tiles when the chip actually has >1 TensorCore.
    if ncores > 1 and n_pad >= ncores * GRAN and pl.cdiv(n_pad, bm_eff) < ncores:
        bm_eff = max(GRAN, (pl.cdiv(n_pad, ncores) // GRAN) * GRAN)
    n_pad = pl.cdiv(n_pad, bm_eff) * bm_eff
    return n_pad, bm_eff


def pack_points(x, n_pad):
    """(N, 2) f32 -> sublane-dense (16, n_pad//8): 8 points per lane column."""
    n = x.shape[0]
    xp = jnp.pad(x.astype(jnp.float32), ((0, n_pad - n), (0, 0)))
    c_total = n_pad // PACK
    return xp.reshape(c_total, PACK, IN_F).transpose((1, 2, 0)).reshape(IN_ROWS, c_total)


def unpack_logits(y_packed, n):
    """(24, n_pad//8) packed logits -> (N, 3)."""
    c_total = y_packed.shape[1]
    y = y_packed.reshape(PACK, OUT_F, c_total).transpose((2, 0, 1))
    return y.reshape(c_total * PACK, OUT_F)[:n]


def pointsnet_forward_packed(x_packed, w1, b1, w2, b2, *, bm_points=65536):
    """Forward pass on the packed (16, C) layout; returns packed (24, C) logits.

    Use this entry point directly when the producer/consumer can work in the
    packed layout (saves the wrapper pack/unpack HBM round trips).
    """
    c_total = x_packed.shape[1]
    bc = max(LANES, bm_points // PACK)
    bc = min(bc, c_total)
    assert c_total % bc == 0, "packed column count must be a multiple of the tile"
    grid = (c_total // bc,)

    # Block-diagonal weights: one (out, in) block per packed point slot.
    eye = jnp.eye(PACK, dtype=jnp.float32)
    w1_blk = jnp.kron(eye, w1.astype(jnp.float32))                      # (256, 16)
    w2_blk = jnp.kron(eye, w2.astype(jnp.float32))                      # (24, 256)
    b1_blk = jnp.tile(b1.astype(jnp.float32), PACK).reshape(HID_ROWS, 1)
    b2_blk = jnp.tile(b2.astype(jnp.float32), PACK).reshape(OUT_ROWS, 1)

    return pl.pallas_call(
        pointsnet_kernel,
        out_shape=jax.ShapeDtypeStruct((OUT_ROWS, c_total), jnp.float32),
        grid_spec=pltpu.PrefetchScalarGridSpec(
            num_scalar_prefetch=0,
            grid=grid,
            in_specs=[
                pl.BlockSpec((IN_ROWS, bc), lambda i: (0, i)),        # packed x tile
                pl.BlockSpec((HID_ROWS, IN_ROWS), lambda i: (0, 0)),  # W1 block-diag
                pl.BlockSpec((HID_ROWS, 1), lambda i: (0, 0)),        # b1
                pl.BlockSpec((OUT_ROWS, HID_ROWS), lambda i: (0, 0)), # W2 block-diag
                pl.BlockSpec((OUT_ROWS, 1), lambda i: (0, 0)),        # b2
            ],
            out_specs=pl.BlockSpec((OUT_ROWS, bc), lambda i: (0, i)),
        ),
        compiler_params=pltpu.CompilerParams(
            dimension_semantics=("parallel",),
            vmem_limit_bytes=32 * 1024 * 1024,
        ),
    )(x_packed, w1_blk, b1_blk, w2_blk, b2_blk)


def pointsnet_forward(x, w1, b1, w2, b2, *, bm=65536, training=False):
    """Forward pass of PointsNet.

    x : (N, 2) float32 points.
    w1: (32, 2), b1: (32,), w2: (3, 32), b2: (3,)  -- PyTorch Linear layout.
    Returns (N, 3) float32 logits.
    """
    if training:
        raise NotImplementedError(
            "Dropout(0.5) training mode is not implemented; eval-mode forward only.")
    n = x.shape[0]
    assert x.shape[1] == IN_F

    n_pad, bm_eff = _choose_tiles(n, bm)
    x_packed = pack_points(x, n_pad)                      # (16, n_pad//8), dense
    y_packed = pointsnet_forward_packed(
        x_packed, w1, b1, w2, b2, bm_points=bm_eff)       # (24, n_pad//8), dense
    # NOTE: the (N, 3) result below gets a lane-padded HBM layout; consume the
    # packed layout directly (pointsnet_forward_packed) to avoid that write.
    return unpack_logits(y_packed, n)


def reference_forward(x, w1, b1, w2, b2):
    h = jnp.maximum(x @ w1.T + b1, 0.0)
    return h @ w2.T + b2


if __name__ == "__main__":
    key = jax.random.PRNGKey(0)
    kx, k1, k2, k3, k4 = jax.random.split(key, 5)

    # Small batch of 2-D points (spiral-sized, like the Lab3 dataset: 300 pts).
    N = 300
    x = jax.random.normal(kx, (N, IN_F), dtype=jnp.float32)

    # PyTorch-style uniform(-1/sqrt(fan_in), +1/sqrt(fan_in)) init, (out, in) layout.
    lim1 = 1.0 / jnp.sqrt(jnp.float32(IN_F))
    lim2 = 1.0 / jnp.sqrt(jnp.float32(HIDDEN))
    w1 = jax.random.uniform(k1, (HIDDEN, IN_F), jnp.float32, -lim1, lim1)
    b1 = jax.random.uniform(k2, (HIDDEN,), jnp.float32, -lim1, lim1)
    w2 = jax.random.uniform(k3, (OUT_F, HIDDEN), jnp.float32, -lim2, lim2)
    b2 = jax.random.uniform(k4, (OUT_F,), jnp.float32, -lim2, lim2)

    out = pointsnet_forward(x, w1, b1, w2, b2)
    out = jax.block_until_ready(out)

    # f32 end-to-end now, so compare directly against the f32 reference.
    ref = reference_forward(x, w1, b1, w2, b2)

    assert out.shape == (N, OUT_F)
    assert jnp.allclose(out, ref, atol=2e-3, rtol=2e-3), "mismatch vs reference"

    print("KERNEL_OK")
</pallas_src>

<mosaic_0001>
module attributes {stable_mosaic.version = 11 : i64} {
  func.func @pointsnet_kernel(%arg0: i32, %arg1: memref<16x128xf32, #tpu.memory_space<vmem>>, %arg2: memref<256x16xf32, #tpu.memory_space<vmem>>, %arg3: memref<256x1xf32, #tpu.memory_space<vmem>>, %arg4: memref<24x256xf32, #tpu.memory_space<vmem>>, %arg5: memref<24x1xf32, #tpu.memory_space<vmem>>, %arg6: memref<24x128xf32, #tpu.memory_space<vmem>>) attributes {dimension_semantics = [#tpu.dimension_semantics<parallel>], iteration_bounds = array<i64: 1>, scalar_prefetch = 0 : i64, scratch_operands = 0 : i64, tpu.core_type = #tpu.core_type<tc>, window_params = [{transform_indices = @transform_0, window_bounds = array<i64: 16, 128>}, {pipeline_mode = #tpu.pipeline_mode<synchronous>, transform_indices = @transform_1, window_bounds = array<i64: 256, 16>}, {pipeline_mode = #tpu.pipeline_mode<synchronous>, transform_indices = @transform_2, window_bounds = array<i64: 256, 1>}, {pipeline_mode = #tpu.pipeline_mode<synchronous>, transform_indices = @transform_3, window_bounds = array<i64: 24, 256>}, {pipeline_mode = #tpu.pipeline_mode<synchronous>, transform_indices = @transform_4, window_bounds = array<i64: 24, 1>}, {transform_indices = @transform_5, window_bounds = array<i64: 24, 128>}]} {
    %c0 = arith.constant 0 : index
    %c0_0 = arith.constant 0 : index
    %0 = vector.load %arg1[%c0, %c0_0] : memref<16x128xf32, #tpu.memory_space<vmem>>, vector<16x128xf32>
    %c0_1 = arith.constant 0 : index
    %c0_2 = arith.constant 0 : index
    %1 = vector.load %arg2[%c0_1, %c0_2] : memref<256x16xf32, #tpu.memory_space<vmem>>, vector<256x16xf32>
    %cst = arith.constant dense<0.000000e+00> : vector<256x128xf32>
    %2 = tpu.matmul %1, %0, %cst {dimension_numbers = #tpu.dot_dimension_numbers<[1], [0], [0], [1], [0, 0, 1, 1], [], []>} : vector<256x16xf32>, vector<16x128xf32>, vector<256x128xf32> -> vector<256x128xf32>
    %c0_3 = arith.constant 0 : index
    %c0_4 = arith.constant 0 : index
    %3 = vector.load %arg3[%c0_3, %c0_4] : memref<256x1xf32, #tpu.memory_space<vmem>>, vector<256x1xf32>
    %4 = vector.broadcast %3 : vector<256x1xf32> to vector<256x128xf32>
    %5 = arith.addf %2, %4 : vector<256x128xf32>
    %cst_5 = arith.constant 0.000000e+00 : f32
    %6 = vector.broadcast %cst_5 : f32 to vector<256x128xf32>
    %7 = arith.maximumf %5, %6 : vector<256x128xf32>
    %c0_6 = arith.constant 0 : index
    %c0_7 = arith.constant 0 : index
    %8 = vector.load %arg4[%c0_6, %c0_7] : memref<24x256xf32, #tpu.memory_space<vmem>>, vector<24x256xf32>
    %cst_8 = arith.constant dense<0.000000e+00> : vector<24x128xf32>
    %9 = tpu.matmul %8, %7, %cst_8 {dimension_numbers = #tpu.dot_dimension_numbers<[1], [0], [0], [1], [0, 0, 1, 1], [], []>} : vector<24x256xf32>, vector<256x128xf32>, vector<24x128xf32> -> vector<24x128xf32>
    %c0_9 = arith.constant 0 : index
    %c0_10 = arith.constant 0 : index
    %10 = vector.load %arg5[%c0_9, %c0_10] : memref<24x1xf32, #tpu.memory_space<vmem>>, vector<24x1xf32>
    %11 = vector.broadcast %10 : vector<24x1xf32> to vector<24x128xf32>
    %12 = arith.addf %9, %11 : vector<24x128xf32>
    %c0_11 = arith.constant 0 : index
    %c0_12 = arith.constant 0 : index
    %13 = vector.load %arg6[%c0_11, %c0_12] : memref<24x128xf32, #tpu.memory_space<vmem>>, vector<24x128xf32>
    tpu.vector_store %arg6[%c0_11, %c0_12], %12 {strides = array<i32>} : memref<24x128xf32, #tpu.memory_space<vmem>>, vector<24x128xf32>,
    return
  }
  func.func @transform_0(%arg0: i32) -> (i32, i32) {
    %c0_i32 = arith.constant 0 : i32
    %c0_i32_0 = arith.constant 0 : i32
    return %c0_i32, %arg0 : i32, i32
  }
  func.func @transform_1(%arg0: i32) -> (i32, i32) {
    %c0_i32 = arith.constant 0 : i32
    %c0_i32_0 = arith.constant 0 : i32
    %c0_i32_1 = arith.constant 0 : i32
    return %c0_i32, %c0_i32_0 : i32, i32
  }
  func.func @transform_2(%arg0: i32) -> (i32, i32) {
    %c0_i32 = arith.constant 0 : i32
    %c0_i32_0 = arith.constant 0 : i32
    %c0_i32_1 = arith.constant 0 : i32
    return %c0_i32, %c0_i32_0 : i32, i32
  }
  func.func @transform_3(%arg0: i32) -> (i32, i32) {
    %c0_i32 = arith.constant 0 : i32
    %c0_i32_0 = arith.constant 0 : i32
    %c0_i32_1 = arith.constant 0 : i32
    return %c0_i32, %c0_i32_0 : i32, i32
  }
  func.func @transform_4(%arg0: i32) -> (i32, i32) {
    %c0_i32 = arith.constant 0 : i32
    %c0_i32_0 = arith.constant 0 : i32
    %c0_i32_1 = arith.constant 0 : i32
    return %c0_i32, %c0_i32_0 : i32, i32
  }
  func.func @transform_5(%arg0: i32) -> (i32, i32) {
    %c0_i32 = arith.constant 0 : i32
    %c0_i32_0 = arith.constant 0 : i32
    return %c0_i32, %arg0 : i32, i32
  }
}

</mosaic_0001>

<llo_original>
// kernel: tpu_custom_call.1
$region0: #{tpu_custom_call.1}
  #allocation0 [shape = 'u32[]', space=smem, size = 0x4, offset = 0x4, fixed_abs, tag = 'smem constant byte address 0x4 - core index']
  #allocation1 [shape = 'u32[72,128]{1,0:T(1,128)}', space=vmem, size = 0x9000, scoped, tag = 'internal scratch']
  %s0 = inlined_call_operand.vmem [shape: f32[16,128], index: 0, kind: input, shape index: {}]
  %s1 = inlined_call_operand.vmem [shape: f32[256,16], index: 1, kind: input, shape index: {}]
  %s2 = inlined_call_operand.vmem [shape: f32[256,1], index: 2, kind: input, shape index: {}]
  %s3 = inlined_call_operand.vmem [shape: f32[24,256], index: 3, kind: input, shape index: {}]
  %s4 = inlined_call_operand.vmem [shape: f32[24,1], index: 4, kind: input, shape index: {}]
  %s5 = inlined_call_operand.hbm [shape: f32[24,128], index: 5, kind: output, shape index: {}]
  %s6 = sld [smem:[#allocation0]]
  $region30: #{tpu_custom_call.1} parent=0
    _
  %s8 = ssub.s32 1, %s6
  %s9 = scalar_select 0, %s8, %s6
  $region1: #{tpu_custom_call.1} parent=0
    #allocation2 [shape = 'u8[12288]{0}', space=vmem, size = 0x3000, scoped, tag = 'output window, operand 0, single buffered']
    #allocation3 [shape = 's32[1]{0}', space=sflag, size = 0x4, scoped, tag = 'scoped memory for tpu_custom_call.1']
    %10 = vsyncpa [#allocation3], 0
    // Predicated region
    $region2: #{tpu_custom_call.1} parent=1 // pred_check
      _
    $region3: #{tpu_custom_call.1} parent=1 // pred_check_branch
      %12 = sbr.rel (0) target = $region5
    $region4: #{tpu_custom_call.1} parent=1 // pred_region
      _
    $region5: #{tpu_custom_call.1} parent=1 // pred_fallthru
      _
    // Predicated region
    $region6: #{tpu_custom_call.1} parent=1 // pred_check
      _
    $region7: #{tpu_custom_call.1} parent=1 // pred_check_branch
      %14 = sbr.rel (0) target = $region9
    $region8: #{tpu_custom_call.1} parent=1 // pred_region
      _
    $region9: #{tpu_custom_call.1} parent=1 // pred_fallthru
      _
    // Predicated region
    $region10: #{tpu_custom_call.1} parent=1 // pred_check
      _
    $region11: #{tpu_custom_call.1} parent=1 // pred_check_branch
      %16 = sbr.rel (0) target = $region13
    $region12: #{tpu_custom_call.1} parent=1 // pred_region
      _
    $region13: #{tpu_custom_call.1} parent=1 // pred_fallthru
      _
    // Predicated region
    $region14: #{tpu_custom_call.1} parent=1 // pred_check
      _
    $region15: #{tpu_custom_call.1} parent=1 // pred_check_branch
      %18 = sbr.rel (0) target = $region17
    $region16: #{tpu_custom_call.1} parent=1 // pred_region
      _
    $region17: #{tpu_custom_call.1} parent=1 // pred_fallthru
      _
    // Predicated region
    $region18: #{tpu_custom_call.1} parent=1 // pred_check
      _
    $region19: #{tpu_custom_call.1} parent=1 // pred_check_branch
      %20 = sbr.rel (0) target = $region21
    $region20: #{tpu_custom_call.1} parent=1 // pred_region
      _
    $region21: #{tpu_custom_call.1} parent=1 // pred_fallthru
      _
    %v21 = vld [vmem:[%s0] sm:$0xff]
    %v22 = vld [vmem:[%s0 + $0x8] sm:$0xff]
    %v23 = vld [vmem:[%s1] sm:$0xff]
    %v24 = vld [vmem:[%s1 + $0x8] sm:$0xff]
    %v25 = vld [vmem:[%s1 + $0x10] sm:$0xff]
    %v26 = vld [vmem:[%s1 + $0x18] sm:$0xff]
    %v27 = vld [vmem:[%s1 + $0x20] sm:$0xff]
    %v28 = vld [vmem:[%s1 + $0x28] sm:$0xff]
    %v29 = vld [vmem:[%s1 + $0x30] sm:$0xff]
    %v30 = vld [vmem:[%s1 + $0x38] sm:$0xff]
    %v31 = vld [vmem:[%s1 + $0x40] sm:$0xff]
    %v32 = vld [vmem:[%s1 + $0x48] sm:$0xff]
    %v33 = vld [vmem:[%s1 + $0x50] sm:$0xff]
    %v34 = vld [vmem:[%s1 + $0x58] sm:$0xff]
    %v35 = vld [vmem:[%s1 + $0x60] sm:$0xff]
    %v36 = vld [vmem:[%s1 + $0x68] sm:$0xff]
    %v37 = vld [vmem:[%s1 + $0x70] sm:$0xff]
    %v38 = vld [vmem:[%s1 + $0x78] sm:$0xff]
    %v39 = vld [vmem:[%s1 + $0x80] sm:$0xff]
    %v40 = vld [vmem:[%s1 + $0x88] sm:$0xff]
    %v41 = vld [vmem:[%s1 + $0x90] sm:$0xff]
    %v42 = vld [vmem:[%s1 + $0x98] sm:$0xff]
    %v43 = vld [vmem:[%s1 + $0xa0] sm:$0xff]
    %v44 = vld [vmem:[%s1 + $0xa8] sm:$0xff]
    %v45 = vld [vmem:[%s1 + $0xb0] sm:$0xff]
    %v46 = vld [vmem:[%s1 + $0xb8] sm:$0xff]
    %v47 = vld [vmem:[%s1 + $0xc0] sm:$0xff]
    %v48 = vld [vmem:[%s1 + $0xc8] sm:$0xff]
    %v49 = vld [vmem:[%s1 + $0xd0] sm:$0xff]
    %v50 = vld [vmem:[%s1 + $0xd8] sm:$0xff]
    %v51 = vld [vmem:[%s1 + $0xe0] sm:$0xff]
    %v52 = vld [vmem:[%s1 + $0xe8] sm:$0xff]
    %v53 = vld [vmem:[%s1 + $0xf0] sm:$0xff]
    %v54 = vld [vmem:[%s1 + $0xf8] sm:$0xff]
    %v55 = vld [vmem:[%s2] sm:$0xff]
    %v56 = vld [vmem:[%s2 + $0x8] sm:$0xff]
    %v57 = vld [vmem:[%s2 + $0x10] sm:$0xff]
    %v58 = vld [vmem:[%s2 + $0x18] sm:$0xff]
    %v59 = vld [vmem:[%s2 + $0x20] sm:$0xff]
    %v60 = vld [vmem:[%s2 + $0x28] sm:$0xff]
    %v61 = vld [vmem:[%s2 + $0x30] sm:$0xff]
    %v62 = vld [vmem:[%s2 + $0x38] sm:$0xff]
    %v63 = vld [vmem:[%s2 + $0x40] sm:$0xff]
    %v64 = vld [vmem:[%s2 + $0x48] sm:$0xff]
    %v65 = vld [vmem:[%s2 + $0x50] sm:$0xff]
    %v66 = vld [vmem:[%s2 + $0x58] sm:$0xff]
    %v67 = vld [vmem:[%s2 + $0x60] sm:$0xff]
    %v68 = vld [vmem:[%s2 + $0x68] sm:$0xff]
    %v69 = vld [vmem:[%s2 + $0x70] sm:$0xff]
    %v70 = vld [vmem:[%s2 + $0x78] sm:$0xff]
    %v71 = vld [vmem:[%s2 + $0x80] sm:$0xff]
    %v72 = vld [vmem:[%s2 + $0x88] sm:$0xff]
    %v73 = vld [vmem:[%s2 + $0x90] sm:$0xff]
    %v74 = vld [vmem:[%s2 + $0x98] sm:$0xff]
    %v75 = vld [vmem:[%s2 + $0xa0] sm:$0xff]
    %v76 = vld [vmem:[%s2 + $0xa8] sm:$0xff]
    %v77 = vld [vmem:[%s2 + $0xb0] sm:$0xff]
    %v78 = vld [vmem:[%s2 + $0xb8] sm:$0xff]
    %v79 = vld [vmem:[%s2 + $0xc0] sm:$0xff]
    %v80 = vld [vmem:[%s2 + $0xc8] sm:$0xff]
    %v81 = vld [vmem:[%s2 + $0xd0] sm:$0xff]
    %v82 = vld [vmem:[%s2 + $0xd8] sm:$0xff]
    %v83 = vld [vmem:[%s2 + $0xe0] sm:$0xff]
    %v84 = vld [vmem:[%s2 + $0xe8] sm:$0xff]
    %v85 = vld [vmem:[%s2 + $0xf0] sm:$0xff]
    %v86 = vld [vmem:[%s2 + $0xf8] sm:$0xff]
    %88 = vset.pattern.permute.xlu0 0
    %89 = vperm.xlu0 %88, %v55
    %v90 = vpop.permute.xlu0 %89
    %93 = vset.pattern.permute.xlu0 0
    %94 = vperm.xlu0 %93, %v56
    %v95 = vpop.permute.xlu0 %94
    %98 = vset.pattern.permute.xlu0 0
    %99 = vperm.xlu0 %98, %v57
    %v100 = vpop.permute.xlu0 %99
    %103 = vset.pattern.permute.xlu0 0
    %104 = vperm.xlu0 %103, %v58
    %v105 = vpop.permute.xlu0 %104
    %108 = vset.pattern.permute.xlu0 0
    %109 = vperm.xlu0 %108, %v59
    %v110 = vpop.permute.xlu0 %109
    %113 = vset.pattern.permute.xlu0 0
    %114 = vperm.xlu0 %113, %v60
    %v115 = vpop.permute.xlu0 %114
    %118 = vset.pattern.permute.xlu0 0
    %119 = vperm.xlu0 %118, %v61
    %v120 = vpop.permute.xlu0 %119
    %123 = vset.pattern.permute.xlu0 0
    %124 = vperm.xlu0 %123, %v62
    %v125 = vpop.permute.xlu0 %124
    %128 = vset.pattern.permute.xlu0 0
    %129 = vperm.xlu0 %128, %v63
    %v130 = vpop.permute.xlu0 %129
    %133 = vset.pattern.permute.xlu0 0
    %134 = vperm.xlu0 %133, %v64
    %v135 = vpop.permute.xlu0 %134
    %138 = vset.pattern.permute.xlu0 0
    %139 = vperm.xlu0 %138, %v65
    %v140 = vpop.permute.xlu0 %139
    %143 = vset.pattern.permute.xlu0 0
    %144 = vperm.xlu0 %143, %v66
    %v145 = vpop.permute.xlu0 %144
    %148 = vset.pattern.permute.xlu0 0
    %149 = vperm.xlu0 %148, %v67
    %v150 = vpop.permute.xlu0 %149
    %153 = vset.pattern.permute.xlu0 0
    %154 = vperm.xlu0 %153, %v68
    %v155 = vpop.permute.xlu0 %154
    %158 = vset.pattern.permute.xlu0 0
    %159 = vperm.xlu0 %158, %v69
    %v160 = vpop.permute.xlu0 %159
    %163 = vset.pattern.permute.xlu0 0
    %164 = vperm.xlu0 %163, %v70
    %v165 = vpop.permute.xlu0 %164
    %168 = vset.pattern.permute.xlu0 0
    %169 = vperm.xlu0 %168, %v71
    %v170 = vpop.permute.xlu0 %169
    %173 = vset.pattern.permute.xlu0 0
    %174 = vperm.xlu0 %173, %v72
    %v175 = vpop.permute.xlu0 %174
    %178 = vset.pattern.permute.xlu0 0
    %179 = vperm.xlu0 %178, %v73
    %v180 = vpop.permute.xlu0 %179
    %183 = vset.pattern.permute.xlu0 0
    %184 = vperm.xlu0 %183, %v74
    %v185 = vpop.permute.xlu0 %184
    %188 = vset.pattern.permute.xlu0 0
    %189 = vperm.xlu0 %188, %v75
    %v190 = vpop.permute.xlu0 %189
    %193 = vset.pattern.permute.xlu0 0
    %194 = vperm.xlu0 %193, %v76
    %v195 = vpop.permute.xlu0 %194
    %198 = vset.pattern.permute.xlu0 0
    %199 = vperm.xlu0 %198, %v77
    %v200 = vpop.permute.xlu0 %199
    %203 = vset.pattern.permute.xlu0 0
    %204 = vperm.xlu0 %203, %v78
    %v205 = vpop.permute.xlu0 %204
    %208 = vset.pattern.permute.xlu0 0
    %209 = vperm.xlu0 %208, %v79
    %v210 = vpop.permute.xlu0 %209
    %213 = vset.pattern.permute.xlu0 0
    %214 = vperm.xlu0 %213, %v80
    %v215 = vpop.permute.xlu0 %214
    %218 = vset.pattern.permute.xlu0 0
    %219 = vperm.xlu0 %218, %v81
    %v220 = vpop.permute.xlu0 %219
    %223 = vset.pattern.permute.xlu0 0
    %224 = vperm.xlu0 %223, %v82
    %v225 = vpop.permute.xlu0 %224
    %228 = vset.pattern.permute.xlu0 0
    %229 = vperm.xlu0 %228, %v83
    %v230 = vpop.permute.xlu0 %229
    %233 = vset.pattern.permute.xlu0 0
    %234 = vperm.xlu0 %233, %v84
    %v235 = vpop.permute.xlu0 %234
    %238 = vset.pattern.permute.xlu0 0
    %239 = vperm.xlu0 %238, %v85
    %v240 = vpop.permute.xlu0 %239
    %243 = vset.pattern.permute.xlu0 0
    %244 = vperm.xlu0 %243, %v86
    %v245 = vpop.permute.xlu0 %244
    %vm247 = vcmask 130048
    %v249 = vsel %vm247, %v23, 0
    %v252 = vsel %vm247, %v24, 0
    %v255 = vsel %vm247, %v25, 0
    %v258 = vsel %vm247, %v26, 0
    %v261 = vsel %vm247, %v27, 0
    %v264 = vsel %vm247, %v28, 0
    %v267 = vsel %vm247, %v29, 0
    %v270 = vsel %vm247, %v30, 0
    %v273 = vsel %vm247, %v31, 0
    %v276 = vsel %vm247, %v32, 0
    %v279 = vsel %vm247, %v33, 0
    %v282 = vsel %vm247, %v34, 0
    %v285 = vsel %vm247, %v35, 0
    %v288 = vsel %vm247, %v36, 0
    %v291 = vsel %vm247, %v37, 0
    %v294 = vsel %vm247, %v38, 0
    %v297 = vsel %vm247, %v39, 0
    %v300 = vsel %vm247, %v40, 0
    %v303 = vsel %vm247, %v41, 0
    %v306 = vsel %vm247, %v42, 0
    %v309 = vsel %vm247, %v43, 0
    %v312 = vsel %vm247, %v44, 0
    %v315 = vsel %vm247, %v45, 0
    %v318 = vsel %vm247, %v46, 0
    %v321 = vsel %vm247, %v47, 0
    %v324 = vsel %vm247, %v48, 0
    %v327 = vsel %vm247, %v49, 0
    %v330 = vsel %vm247, %v50, 0
    %v333 = vsel %vm247, %v51, 0
    %v336 = vsel %vm247, %v52, 0
    %v339 = vsel %vm247, %v53, 0
    %v342 = vsel %vm247, %v54, 0
    %344 = vmatpush.msra.mxu0 0.0
    %345 = vmatpush.msra.mxu0 0.0
    %346 = vmatpush.msra.mxu0 0.0
    %347 = vmatpush.msra.mxu0 0.0
    %348 = vmatpush.msra.mxu0 0.0
    %349 = vmatpush.msra.mxu0 0.0
    %350 = vmatpush.msra.mxu0 0.0
    %351 = vmatpush.msra.mxu0 0.0
    %352 = vmatpush.msra.mxu0 0.0
    %353 = vmatpush.msra.mxu0 0.0
    %354 = vmatpush.msra.mxu0 0.0
    %355 = vmatpush.msra.mxu0 0.0
    %356 = vmatpush.msra.mxu0 0.0
    %357 = vmatpush.msra.mxu0 0.0
    %358 = vmatpush.msra.mxu0 %v22
    %359 = vmatpush.msra.mxu0 %v21
    %360 = vmatmul.f32.gmra.mxu0 %v249
    %v361 = vpop.f32.mrf.mxu0
    %v362 = vadd.f32 %v90, %v361
    %363 = vmatmul.f32.gmra.mxu0 %v252
    %v364 = vpop.f32.mrf.mxu0
    %v365 = vadd.f32 %v95, %v364
    %366 = vmatmul.f32.gmra.mxu0 %v255
    %v367 = vpop.f32.mrf.mxu0
    %v368 = vadd.f32 %v100, %v367
    %369 = vmatmul.f32.gmra.mxu0 %v258
    %v370 = vpop.f32.mrf.mxu0
    %v371 = vadd.f32 %v105, %v370
    %372 = vmatmul.f32.gmra.mxu0 %v261
    %v373 = vpop.f32.mrf.mxu0
    %v374 = vadd.f32 %v110, %v373
    %375 = vmatmul.f32.gmra.mxu0 %v264
    %v376 = vpop.f32.mrf.mxu0
    %v377 = vadd.f32 %v115, %v376
    %378 = vmatmul.f32.gmra.mxu0 %v267
    %v379 = vpop.f32.mrf.mxu0
    %v380 = vadd.f32 %v120, %v379
    %381 = vmatmul.f32.gmra.mxu0 %v270
    %v382 = vpop.f32.mrf.mxu0
    %v383 = vadd.f32 %v125, %v382
    %384 = vmatmul.f32.gmra.mxu0 %v273
    %v385 = vpop.f32.mrf.mxu0
    %v386 = vadd.f32 %v130, %v385
    %387 = vmatmul.f32.gmra.mxu0 %v276
    %v388 = vpop.f32.mrf.mxu0
    %v389 = vadd.f32 %v135, %v388
    %390 = vmatmul.f32.gmra.mxu0 %v279
    %v391 = vpop.f32.mrf.mxu0
    %v392 = vadd.f32 %v140, %v391
    %393 = vmatmul.f32.gmra.mxu0 %v282
    %v394 = vpop.f32.mrf.mxu0
    %v395 = vadd.f32 %v145, %v394
    %396 = vmatmul.f32.gmra.mxu0 %v285
    %v397 = vpop.f32.mrf.mxu0
    %v398 = vadd.f32 %v150, %v397
    %399 = vmatmul.f32.gmra.mxu0 %v288
    %v400 = vpop.f32.mrf.mxu0
    %v401 = vadd.f32 %v155, %v400
    %402 = vmatmul.f32.gmra.mxu0 %v291
    %v403 = vpop.f32.mrf.mxu0
    %v404 = vadd.f32 %v160, %v403
    %405 = vmatmul.f32.gmra.mxu0 %v294
    %v406 = vpop.f32.mrf.mxu0
    %v407 = vadd.f32 %v165, %v406
    %408 = vmatmul.f32.gmra.mxu0 %v297
    %v409 = vpop.f32.mrf.mxu0
    %v410 = vadd.f32 %v170, %v409
    %411 = vmatmul.f32.gmra.mxu0 %v300
    %v412 = vpop.f32.mrf.mxu0
    %v413 = vadd.f32 %v175, %v412
    %414 = vmatmul.f32.gmra.mxu0 %v303
    %v415 = vpop.f32.mrf.mxu0
    %v416 = vadd.f32 %v180, %v415
    %417 = vmatmul.f32.gmra.mxu0 %v306
    %v418 = vpop.f32.mrf.mxu0
    %v419 = vadd.f32 %v185, %v418
    %420 = vmatmul.f32.gmra.mxu0 %v309
    %v421 = vpop.f32.mrf.mxu0
    %v422 = vadd.f32 %v190, %v421
    %423 = vmatmul.f32.gmra.mxu0 %v312
    %v424 = vpop.f32.mrf.mxu0
    %v425 = vadd.f32 %v195, %v424
    %426 = vmatmul.f32.gmra.mxu0 %v315
    %v427 = vpop.f32.mrf.mxu0
    %v428 = vadd.f32 %v200, %v427
    %429 = vmatmul.f32.gmra.mxu0 %v318
    %v430 = vpop.f32.mrf.mxu0
    %v431 = vadd.f32 %v205, %v430
    %432 = vmatmul.f32.gmra.mxu0 %v321
    %v433 = vpop.f32.mrf.mxu0
    %v434 = vadd.f32 %v210, %v433
    %435 = vmatmul.f32.gmra.mxu0 %v324
    %v436 = vpop.f32.mrf.mxu0
    %v437 = vadd.f32 %v215, %v436
    %438 = vmatmul.f32.gmra.mxu0 %v327
    %v439 = vpop.f32.mrf.mxu0
    %v440 = vadd.f32 %v220, %v439
    %441 = vmatmul.f32.gmra.mxu0 %v330
    %v442 = vpop.f32.mrf.mxu0
    %v443 = vadd.f32 %v225, %v442
    %444 = vmatmul.f32.gmra.mxu0 %v333
    %v445 = vpop.f32.mrf.mxu0
    %v446 = vadd.f32 %v230, %v445
    %447 = vmatmul.f32.gmra.mxu0 %v336
    %v448 = vpop.f32.mrf.mxu0
    %v449 = vadd.f32 %v235, %v448
    %450 = vmatmul.f32.gmra.mxu0 %v339
    %v451 = vpop.f32.mrf.mxu0
    %v452 = vadd.f32 %v240, %v451
    %453 = vmatmul.f32.gmra.mxu0 %v342
    %v454 = vpop.f32.mrf.mxu0
    %v455 = vadd.f32 %v245, %v454
    %456 = vdwg.mxu0
    %v457 = vmax.f32 %v362, 0.0
    %v458 = vmax.f32 %v365, 0.0
    %v459 = vmax.f32 %v368, 0.0
    %v460 = vmax.f32 %v371, 0.0
    %v461 = vmax.f32 %v374, 0.0
    %v462 = vmax.f32 %v377, 0.0
    %v463 = vmax.f32 %v380, 0.0
    %v464 = vmax.f32 %v383, 0.0
    %v465 = vmax.f32 %v386, 0.0
    %v466 = vmax.f32 %v389, 0.0
    %v467 = vmax.f32 %v392, 0.0
    %v468 = vmax.f32 %v395, 0.0
    %v469 = vmax.f32 %v398, 0.0
    %v470 = vmax.f32 %v401, 0.0
    %v471 = vmax.f32 %v404, 0.0
    %v472 = vmax.f32 %v407, 0.0
    %v473 = vmax.f32 %v410, 0.0
    %v474 = vmax.f32 %v413, 0.0
    %v475 = vmax.f32 %v416, 0.0
    %v476 = vmax.f32 %v419, 0.0
    %v477 = vmax.f32 %v422, 0.0
    %v478 = vmax.f32 %v425, 0.0
    %v479 = vmax.f32 %v428, 0.0
    %v480 = vmax.f32 %v431, 0.0
    %v481 = vmax.f32 %v434, 0.0
    %v482 = vmax.f32 %v437, 0.0
    %v483 = vmax.f32 %v440, 0.0
    %v484 = vmax.f32 %v443, 0.0
    %v485 = vmax.f32 %v446, 0.0
    %v486 = vmax.f32 %v449, 0.0
    %v487 = vmax.f32 %v452, 0.0
    %v488 = vmax.f32 %v455, 0.0
    %v489 = vld [vmem:[%s3] sm:$0xff]
    %v490 = vld [vmem:[%s3 + $0x8] sm:$0xff]
    %v491 = vld [vmem:[%s3 + $0x10] sm:$0xff]
    %v492 = vld [vmem:[%s3 + $0x18] sm:$0xff]
    %v493 = vld [vmem:[%s3 + $0x20] sm:$0xff]
    %v494 = vld [vmem:[%s3 + $0x28] sm:$0xff]
    %v495 = vld [vmem:[%s4] sm:$0xff]
    %v496 = vld [vmem:[%s4 + $0x8] sm:$0xff]
    %v497 = vld [vmem:[%s4 + $0x10] sm:$0xff]
    %499 = vset.pattern.permute.xlu0 0
    %500 = vperm.xlu0 %499, %v495
    %v501 = vpop.permute.xlu0 %500
    %504 = vset.pattern.permute.xlu0 0
    %505 = vperm.xlu0 %504, %v496
    %v506 = vpop.permute.xlu0 %505
    %509 = vset.pattern.permute.xlu0 0
    %510 = vperm.xlu0 %509, %v497
    %v511 = vpop.permute.xlu0 %510
    %513 = vmatpush.msra.mxu0 %v472
    %514 = vmatpush.msra.mxu0 %v471
    %515 = vmatpush.msra.mxu0 %v470
    %516 = vmatpush.msra.mxu0 %v469
    %517 = vmatpush.msra.mxu0 %v468
    %518 = vmatpush.msra.mxu0 %v467
    %519 = vmatpush.msra.mxu0 %v466
    %520 = vmatpush.msra.mxu0 %v465
    %521 = vmatpush.msra.mxu0 %v464
    %522 = vmatpush.msra.mxu0 %v463
    %523 = vmatpush.msra.mxu0 %v462
    %524 = vmatpush.msra.mxu0 %v461
    %525 = vmatpush.msra.mxu0 %v460
    %526 = vmatpush.msra.mxu0 %v459
    %527 = vmatpush.msra.mxu0 %v458
    %528 = vmatpush.msra.mxu0 %v457
    %529 = vmatmul.f32.gmra.mxu0 %v489
    %v530 = vpop.f32.mrf.mxu0
    %v531 = vadd.f32 %v501, %v530
    %532 = vmatmul.f32.gmra.mxu0 %v491
    %v533 = vpop.f32.mrf.mxu0
    %v534 = vadd.f32 %v506, %v533
    %535 = vmatmul.f32.gmra.mxu0 %v493
    %v536 = vpop.f32.mrf.mxu0
    %v537 = vadd.f32 %v511, %v536
    %538 = vdwg.mxu0
    %539 = vmatpush.msra.mxu0 %v488
    %540 = vmatpush.msra.mxu0 %v487
    %541 = vmatpush.msra.mxu0 %v486
    %542 = vmatpush.msra.mxu0 %v485
    %543 = vmatpush.msra.mxu0 %v484
    %544 = vmatpush.msra.mxu0 %v483
    %545 = vmatpush.msra.mxu0 %v482
    %546 = vmatpush.msra.mxu0 %v481
    %547 = vmatpush.msra.mxu0 %v480
    %548 = vmatpush.msra.mxu0 %v479
    %549 = vmatpush.msra.mxu0 %v478
    %550 = vmatpush.msra.mxu0 %v477
    %551 = vmatpush.msra.mxu0 %v476
    %552 = vmatpush.msra.mxu0 %v475
    %553 = vmatpush.msra.mxu0 %v474
    %554 = vmatpush.msra.mxu0 %v473
    %555 = vmatmul.f32.gmra.mxu0 %v490
    %v556 = vpop.f32.mrf.mxu0
    %v557 = vadd.f32 %v531, %v556
    %558 = vmatmul.f32.gmra.mxu0 %v492
    %v559 = vpop.f32.mrf.mxu0
    %v560 = vadd.f32 %v534, %v559
    %561 = vmatmul.f32.gmra.mxu0 %v494
    %v562 = vpop.f32.mrf.mxu0
    %v563 = vadd.f32 %v537, %v562
    %564 = vdwg.mxu0
    %565 = vst [vmem:[#allocation2] sm:$0xff] %v557
    %566 = vst [vmem:[#allocation2 + $0x8] sm:$0xff] %v560
    %567 = vst [vmem:[#allocation2 + $0x10] sm:$0xff] %v563
    // Predicated region
    $region22: #{tpu_custom_call.1} parent=1 // pred_check
      _
    $region23: #{tpu_custom_call.1} parent=1 // pred_check_branch
      %569 = sbr.rel (0) target = $region25
    $region24: #{tpu_custom_call.1} parent=1 // pred_region
      %571 = vsyncadd [#allocation3], 0
      %s572 = sshll.u32 [#allocation2], 4
      %s573 = int_to_ptr.vmem [resolvable:$true] %s572
      %s574 = sshll.u32 %s5, 4
      %s575 = int_to_ptr.hbm [resolvable:$true] %s574
      %580 = dma.vmem_to_hbm [thread:$0]  %s573, 384, %s575, [#allocation3], 128, 128, 8
    $region25: #{tpu_custom_call.1} parent=1 // pred_fallthru
      _
    // Predicated region
    $region26: #{tpu_custom_call.1} parent=1 // pred_check
      _
    $region27: #{tpu_custom_call.1} parent=1 // pred_check_branch
      %582 = sbr.rel (0) target = $region29
    $region28: #{tpu_custom_call.1} parent=1 // pred_region
      %584 = dma.done [#allocation3], 384
    $region29: #{tpu_custom_call.1} parent=1 // pred_fallthru
      _
    %585 = vsyncpa [#allocation3], 1

</llo_original>
